<compile_context>
chip_gen: v5e
topology: v5e:2x2
jax: 0.10.0
libtpu: 0.0.40
codegen_flags: <defaults>
</compile_context>

<pallas_src>
import functools

import jax
import jax.numpy as jnp
from jax.experimental import pallas as pl
from jax.experimental.pallas import tpu as pltpu  # noqa: F401  (TPU backend; kept for VMEM scratch if shapes grow)


# ---------------------------------------------------------------------------
# Fused Pallas kernel: encoders + tanh RNN + top linear in one invocation
# ---------------------------------------------------------------------------
def _fused_concat_chain_kernel(
    v_ref,      # (num_v * P, d_v)   row-stacked, per-vertex concatenated features
    e_ref,      # (num_e * P, d_e)   row-stacked, per-edge concatenated features
    wv_ref, bv_ref,        # (d_v, H), (1, H)
    we_ref, be_ref,        # (d_e, H), (1, H)
    wih_ref, whh_ref, brnn_ref,   # (H, H), (H, H), (1, H)  [brnn = b_ih + b_hh]
    wtop_ref, btop_ref,    # (T*H, H), (1, H)
    out_ref,               # (P, H)
    *, pad_n, num_v, num_e, hidden,
):
    f32 = jnp.float32
    seq_len = num_v + num_e
    H = hidden
    P = pad_n

    # 1. batched feature encoders: relu(x @ W + b)  (one matmul for all vertices,
    #    one for all edges -> dense sublane occupancy, 2 MXU pushes instead of 7)
    v_enc = jnp.maximum(
        jnp.dot(v_ref[...], wv_ref[...], preferred_element_type=f32) + bv_ref[...], 0.0)
    e_enc = jnp.maximum(
        jnp.dot(e_ref[...], we_ref[...], preferred_element_type=f32) + be_ref[...], 0.0)

    # 2. hoist the input projection out of the recurrence:
    #    pre_x = enc @ W_ih + (b_ih + b_hh), batched over all time steps.
    pre_v = jnp.dot(v_enc, wih_ref[...], preferred_element_type=f32) + brnn_ref[...]
    pre_e = jnp.dot(e_enc, wih_ref[...], preferred_element_type=f32) + brnn_ref[...]

    whh = whh_ref[...]

    # 3. unrolled tanh recurrence (T = 7).  h0 == 0, so step 0 needs no W_hh matmul.
    #    combined[::2] = vertex encodings, combined[1::2] = edge encodings.
    h = jnp.tanh(pre_v[0:P, :])
    # 4. top linear folded into the loop: out = b_top + sum_t h_t @ W_top[t*H:(t+1)*H]
    acc = jnp.dot(h, wtop_ref[0:H, :], preferred_element_type=f32)
    for t in range(1, seq_len):
        idx = t // 2
        if t % 2 == 0:
            pre_t = pre_v[idx * P:(idx + 1) * P, :]
        else:
            pre_t = pre_e[idx * P:(idx + 1) * P, :]
        h = jnp.tanh(pre_t + jnp.dot(h, whh, preferred_element_type=f32))
        acc = acc + jnp.dot(h, wtop_ref[t * H:(t + 1) * H, :],
                            preferred_element_type=f32)

    out_ref[...] = (acc + btop_ref[...]).astype(out_ref.dtype)


# ---------------------------------------------------------------------------
# Wrapper: tiny JAX glue (concat/stack/pad of the raw feature tuples) + 1 kernel
# ---------------------------------------------------------------------------
def _stack_and_pad_rows(groups, pad_n):
    """groups: list of (n, d) arrays -> (len(groups) * pad_n, d), rows zero-padded."""
    x = jnp.stack(groups, axis=0)                       # (G, n, d)
    g, n, d = x.shape
    if pad_n > n:
        x = jnp.pad(x, ((0, 0), (0, pad_n - n), (0, 0)))
    return x.reshape(g * pad_n, d)


def concat_chain_encoder_forward(v_features, e_features, params):
    num_v, num_e = len(v_features), len(e_features)
    n = v_features[0][0].shape[0]
    H = params["w_v"].shape[1]
    pad_n = ((n + 7) // 8) * 8          # sublane-align the batch rows

    # per-tuple feature concat, then row-stack all vertices / all edges
    v_in = _stack_and_pad_rows([jnp.concatenate(t, axis=1) for t in v_features], pad_n)
    e_in = _stack_and_pad_rows([jnp.concatenate(t, axis=1) for t in e_features], pad_n)
    b_rnn = (params["b_ih"] + params["b_hh"]).reshape(1, H)

    kernel = functools.partial(
        _fused_concat_chain_kernel,
        pad_n=pad_n, num_v=num_v, num_e=num_e, hidden=H,
    )

    out = pl.pallas_call(
        kernel,
        out_shape=jax.ShapeDtypeStruct((pad_n, H), jnp.float32),
        # small full-array operands: default whole-array VMEM placement, no grid.
    )(
        v_in, e_in,
        params["w_v"], params["b_v"].reshape(1, H),
        params["w_e"], params["b_e"].reshape(1, H),
        params["w_ih"], params["w_hh"], b_rnn,
        params["w_top"], params["b_top"].reshape(1, H),
    )
    return out[:n]


# ---------------------------------------------------------------------------
# Pure-JAX reference (mirrors the PyTorch module) for correctness checking
# ---------------------------------------------------------------------------
def reference_forward(v_features, e_features, params):
    v_encs = [
        jax.nn.relu(jnp.concatenate(tup, axis=1) @ params["w_v"] + params["b_v"])
        for tup in v_features
    ]
    e_encs = [
        jax.nn.relu(jnp.concatenate(tup, axis=1) @ params["w_e"] + params["b_e"])
        for tup in e_features
    ]
    seq_length = len(v_encs) + len(e_encs)
    combined = [None] * seq_length
    combined[::2] = v_encs
    combined[1::2] = e_encs
    xs = jnp.stack(combined, axis=0)
    T, N, H = xs.shape
    h = jnp.zeros((N, H), jnp.float32)
    outs = []
    for t in range(T):
        h = jnp.tanh(xs[t] @ params["w_ih"] + h @ params["w_hh"]
                     + params["b_ih"] + params["b_hh"])
        outs.append(h)
    out = jnp.stack(outs, axis=0)
    flat = jnp.transpose(out, (1, 0, 2)).reshape(N, T * H)
    return flat @ params["w_top"] + params["b_top"]


# ---------------------------------------------------------------------------
# Main
# ---------------------------------------------------------------------------
if __name__ == "__main__":
    # Module config (4 vertices + 3 edges -> seq_length 7, matching top_linear)
    v_feature_lengths = [8, 8]      # sum = 16
    e_feature_lengths = [4, 4]      # sum = 8
    out_length = 32                 # H (= feature_enc_length = hidden_size)
    num_vertices, num_edges = 4, 3
    seq_length = num_vertices + num_edges   # 7
    batch = 2

    key = jax.random.PRNGKey(0)
    keys = jax.random.split(key, 16)

    def init(k, shape, scale=0.1):
        return (scale * jax.random.normal(k, shape)).astype(jnp.float32)

    d_v, d_e, H = sum(v_feature_lengths), sum(e_feature_lengths), out_length
    params = {
        "w_v":   init(keys[0], (d_v, H)),
        "b_v":   init(keys[1], (H,)),
        "w_e":   init(keys[2], (d_e, H)),
        "b_e":   init(keys[3], (H,)),
        "w_ih":  init(keys[4], (H, H)),
        "w_hh":  init(keys[5], (H, H)),
        "b_ih":  init(keys[6], (H,)),
        "b_hh":  init(keys[7], (H,)),
        "w_top": init(keys[8], (seq_length * H, H)),
        "b_top": init(keys[9], (H,)),
    }

    # Inputs: v_features = 4 tuples of (N, 8) arrays, e_features = 3 tuples of (N, 4)
    ik = jax.random.split(keys[10], num_vertices * len(v_feature_lengths)
                          + num_edges * len(e_feature_lengths))
    ki = iter(ik)
    v_features = [
        tuple(init(next(ki), (batch, d), scale=1.0) for d in v_feature_lengths)
        for _ in range(num_vertices)
    ]
    e_features = [
        tuple(init(next(ki), (batch, d), scale=1.0) for d in e_feature_lengths)
        for _ in range(num_edges)
    ]

    out = concat_chain_encoder_forward(v_features, e_features, params)
    out = jax.block_until_ready(out)

    ref = reference_forward(v_features, e_features, params)
    assert out.shape == (batch, out_length), out.shape
    assert jnp.allclose(out, ref, atol=2e-4, rtol=2e-4), (
        f"max abs err = {jnp.max(jnp.abs(out - ref))}"
    )
    print("KERNEL_OK")
</pallas_src>

<mosaic_0001>
module attributes {stable_mosaic.version = 11 : i64} {
  func.func @_fused_concat_chain_kernel(%arg0: memref<32x16xf32, #tpu.memory_space<vmem>>, %arg1: memref<24x8xf32, #tpu.memory_space<vmem>>, %arg2: memref<16x32xf32, #tpu.memory_space<vmem>>, %arg3: memref<1x32xf32, #tpu.memory_space<vmem>>, %arg4: memref<8x32xf32, #tpu.memory_space<vmem>>, %arg5: memref<1x32xf32, #tpu.memory_space<vmem>>, %arg6: memref<32x32xf32, #tpu.memory_space<vmem>>, %arg7: memref<32x32xf32, #tpu.memory_space<vmem>>, %arg8: memref<1x32xf32, #tpu.memory_space<vmem>>, %arg9: memref<224x32xf32, #tpu.memory_space<vmem>>, %arg10: memref<1x32xf32, #tpu.memory_space<vmem>>, %arg11: memref<8x32xf32, #tpu.memory_space<vmem>>) attributes {dimension_semantics = [], scalar_prefetch = 0 : i64, scratch_operands = 0 : i64, tpu.core_type = #tpu.core_type<tc>} {
    %c0 = arith.constant 0 : index
    %c0_0 = arith.constant 0 : index
    %0 = vector.load %arg0[%c0, %c0_0] : memref<32x16xf32, #tpu.memory_space<vmem>>, vector<32x16xf32>
    %c0_1 = arith.constant 0 : index
    %c0_2 = arith.constant 0 : index
    %1 = vector.load %arg2[%c0_1, %c0_2] : memref<16x32xf32, #tpu.memory_space<vmem>>, vector<16x32xf32>
    %cst = arith.constant dense<0.000000e+00> : vector<32x32xf32>
    %2 = tpu.matmul %0, %1, %cst {dimension_numbers = #tpu.dot_dimension_numbers<[1], [0], [0], [1], [0, 0, 1, 1], [], []>} : vector<32x16xf32>, vector<16x32xf32>, vector<32x32xf32> -> vector<32x32xf32>
    %c0_3 = arith.constant 0 : index
    %c0_4 = arith.constant 0 : index
    %3 = vector.load %arg3[%c0_3, %c0_4] : memref<1x32xf32, #tpu.memory_space<vmem>>, vector<1x32xf32>
    %4 = vector.broadcast %3 : vector<1x32xf32> to vector<32x32xf32>
    %5 = arith.addf %2, %4 : vector<32x32xf32>
    %cst_5 = arith.constant 0.000000e+00 : f32
    %6 = vector.broadcast %cst_5 : f32 to vector<32x32xf32>
    %7 = arith.maximumf %5, %6 : vector<32x32xf32>
    %c0_6 = arith.constant 0 : index
    %c0_7 = arith.constant 0 : index
    %8 = vector.load %arg1[%c0_6, %c0_7] : memref<24x8xf32, #tpu.memory_space<vmem>>, vector<24x8xf32>
    %c0_8 = arith.constant 0 : index
    %c0_9 = arith.constant 0 : index
    %9 = vector.load %arg4[%c0_8, %c0_9] : memref<8x32xf32, #tpu.memory_space<vmem>>, vector<8x32xf32>
    %cst_10 = arith.constant dense<0.000000e+00> : vector<24x32xf32>
    %10 = tpu.matmul %8, %9, %cst_10 {dimension_numbers = #tpu.dot_dimension_numbers<[1], [0], [0], [1], [0, 0, 1, 1], [], []>} : vector<24x8xf32>, vector<8x32xf32>, vector<24x32xf32> -> vector<24x32xf32>
    %c0_11 = arith.constant 0 : index
    %c0_12 = arith.constant 0 : index
    %11 = vector.load %arg5[%c0_11, %c0_12] : memref<1x32xf32, #tpu.memory_space<vmem>>, vector<1x32xf32>
    %12 = vector.broadcast %11 : vector<1x32xf32> to vector<24x32xf32>
    %13 = arith.addf %10, %12 : vector<24x32xf32>
    %cst_13 = arith.constant 0.000000e+00 : f32
    %14 = vector.broadcast %cst_13 : f32 to vector<24x32xf32>
    %15 = arith.maximumf %13, %14 : vector<24x32xf32>
    %c0_14 = arith.constant 0 : index
    %c0_15 = arith.constant 0 : index
    %16 = vector.load %arg6[%c0_14, %c0_15] : memref<32x32xf32, #tpu.memory_space<vmem>>, vector<32x32xf32>
    %cst_16 = arith.constant dense<0.000000e+00> : vector<32x32xf32>
    %17 = tpu.matmul %7, %16, %cst_16 {dimension_numbers = #tpu.dot_dimension_numbers<[1], [0], [0], [1], [0, 0, 1, 1], [], []>} : vector<32x32xf32>, vector<32x32xf32>, vector<32x32xf32> -> vector<32x32xf32>
    %c0_17 = arith.constant 0 : index
    %c0_18 = arith.constant 0 : index
    %18 = vector.load %arg8[%c0_17, %c0_18] : memref<1x32xf32, #tpu.memory_space<vmem>>, vector<1x32xf32>
    %19 = vector.broadcast %18 : vector<1x32xf32> to vector<32x32xf32>
    %20 = arith.addf %17, %19 : vector<32x32xf32>
    %c0_19 = arith.constant 0 : index
    %c0_20 = arith.constant 0 : index
    %21 = vector.load %arg6[%c0_19, %c0_20] : memref<32x32xf32, #tpu.memory_space<vmem>>, vector<32x32xf32>
    %cst_21 = arith.constant dense<0.000000e+00> : vector<24x32xf32>
    %22 = tpu.matmul %15, %21, %cst_21 {dimension_numbers = #tpu.dot_dimension_numbers<[1], [0], [0], [1], [0, 0, 1, 1], [], []>} : vector<24x32xf32>, vector<32x32xf32>, vector<24x32xf32> -> vector<24x32xf32>
    %c0_22 = arith.constant 0 : index
    %c0_23 = arith.constant 0 : index
    %23 = vector.load %arg8[%c0_22, %c0_23] : memref<1x32xf32, #tpu.memory_space<vmem>>, vector<1x32xf32>
    %24 = vector.broadcast %23 : vector<1x32xf32> to vector<24x32xf32>
    %25 = arith.addf %22, %24 : vector<24x32xf32>
    %c0_24 = arith.constant 0 : index
    %c0_25 = arith.constant 0 : index
    %26 = vector.load %arg7[%c0_24, %c0_25] : memref<32x32xf32, #tpu.memory_space<vmem>>, vector<32x32xf32>
    %27 = vector.extract_strided_slice %20 {offsets = [0, 0], sizes = [8, 32], strides = [1, 1]} : vector<32x32xf32> to vector<8x32xf32>
    %28 = math.tanh %27 : vector<8x32xf32>
    %c0_26 = arith.constant 0 : index
    %c0_27 = arith.constant 0 : index
    %29 = vector.load %arg9[%c0_26, %c0_27] : memref<224x32xf32, #tpu.memory_space<vmem>>, vector<32x32xf32>
    %cst_28 = arith.constant dense<0.000000e+00> : vector<8x32xf32>
    %30 = tpu.matmul %28, %29, %cst_28 {dimension_numbers = #tpu.dot_dimension_numbers<[1], [0], [0], [1], [0, 0, 1, 1], [], []>} : vector<8x32xf32>, vector<32x32xf32>, vector<8x32xf32> -> vector<8x32xf32>
    %31 = vector.extract_strided_slice %25 {offsets = [0, 0], sizes = [8, 32], strides = [1, 1]} : vector<24x32xf32> to vector<8x32xf32>
    %cst_29 = arith.constant dense<0.000000e+00> : vector<8x32xf32>
    %32 = tpu.matmul %28, %26, %cst_29 {dimension_numbers = #tpu.dot_dimension_numbers<[1], [0], [0], [1], [0, 0, 1, 1], [], []>} : vector<8x32xf32>, vector<32x32xf32>, vector<8x32xf32> -> vector<8x32xf32>
    %33 = arith.addf %31, %32 : vector<8x32xf32>
    %34 = math.tanh %33 : vector<8x32xf32>
    %c32 = arith.constant 32 : index
    %c0_30 = arith.constant 0 : index
    %35 = vector.load %arg9[%c32, %c0_30] : memref<224x32xf32, #tpu.memory_space<vmem>>, vector<32x32xf32>
    %cst_31 = arith.constant dense<0.000000e+00> : vector<8x32xf32>
    %36 = tpu.matmul %34, %35, %cst_31 {dimension_numbers = #tpu.dot_dimension_numbers<[1], [0], [0], [1], [0, 0, 1, 1], [], []>} : vector<8x32xf32>, vector<32x32xf32>, vector<8x32xf32> -> vector<8x32xf32>
    %37 = arith.addf %30, %36 : vector<8x32xf32>
    %38 = vector.extract_strided_slice %20 {offsets = [8, 0], sizes = [8, 32], strides = [1, 1]} : vector<32x32xf32> to vector<8x32xf32>
    %cst_32 = arith.constant dense<0.000000e+00> : vector<8x32xf32>
    %39 = tpu.matmul %34, %26, %cst_32 {dimension_numbers = #tpu.dot_dimension_numbers<[1], [0], [0], [1], [0, 0, 1, 1], [], []>} : vector<8x32xf32>, vector<32x32xf32>, vector<8x32xf32> -> vector<8x32xf32>
    %40 = arith.addf %38, %39 : vector<8x32xf32>
    %41 = math.tanh %40 : vector<8x32xf32>
    %c64 = arith.constant 64 : index
    %c0_33 = arith.constant 0 : index
    %42 = vector.load %arg9[%c64, %c0_33] : memref<224x32xf32, #tpu.memory_space<vmem>>, vector<32x32xf32>
    %cst_34 = arith.constant dense<0.000000e+00> : vector<8x32xf32>
    %43 = tpu.matmul %41, %42, %cst_34 {dimension_numbers = #tpu.dot_dimension_numbers<[1], [0], [0], [1], [0, 0, 1, 1], [], []>} : vector<8x32xf32>, vector<32x32xf32>, vector<8x32xf32> -> vector<8x32xf32>
    %44 = arith.addf %37, %43 : vector<8x32xf32>
    %45 = vector.extract_strided_slice %25 {offsets = [8, 0], sizes = [8, 32], strides = [1, 1]} : vector<24x32xf32> to vector<8x32xf32>
    %cst_35 = arith.constant dense<0.000000e+00> : vector<8x32xf32>
    %46 = tpu.matmul %41, %26, %cst_35 {dimension_numbers = #tpu.dot_dimension_numbers<[1], [0], [0], [1], [0, 0, 1, 1], [], []>} : vector<8x32xf32>, vector<32x32xf32>, vector<8x32xf32> -> vector<8x32xf32>
    %47 = arith.addf %45, %46 : vector<8x32xf32>
    %48 = math.tanh %47 : vector<8x32xf32>
    %c96 = arith.constant 96 : index
    %c0_36 = arith.constant 0 : index
    %49 = vector.load %arg9[%c96, %c0_36] : memref<224x32xf32, #tpu.memory_space<vmem>>, vector<32x32xf32>
    %cst_37 = arith.constant dense<0.000000e+00> : vector<8x32xf32>
    %50 = tpu.matmul %48, %49, %cst_37 {dimension_numbers = #tpu.dot_dimension_numbers<[1], [0], [0], [1], [0, 0, 1, 1], [], []>} : vector<8x32xf32>, vector<32x32xf32>, vector<8x32xf32> -> vector<8x32xf32>
    %51 = arith.addf %44, %50 : vector<8x32xf32>
    %52 = vector.extract_strided_slice %20 {offsets = [16, 0], sizes = [8, 32], strides = [1, 1]} : vector<32x32xf32> to vector<8x32xf32>
    %cst_38 = arith.constant dense<0.000000e+00> : vector<8x32xf32>
    %53 = tpu.matmul %48, %26, %cst_38 {dimension_numbers = #tpu.dot_dimension_numbers<[1], [0], [0], [1], [0, 0, 1, 1], [], []>} : vector<8x32xf32>, vector<32x32xf32>, vector<8x32xf32> -> vector<8x32xf32>
    %54 = arith.addf %52, %53 : vector<8x32xf32>
    %55 = math.tanh %54 : vector<8x32xf32>
    %c128 = arith.constant 128 : index
    %c0_39 = arith.constant 0 : index
    %56 = vector.load %arg9[%c128, %c0_39] : memref<224x32xf32, #tpu.memory_space<vmem>>, vector<32x32xf32>
    %cst_40 = arith.constant dense<0.000000e+00> : vector<8x32xf32>
    %57 = tpu.matmul %55, %56, %cst_40 {dimension_numbers = #tpu.dot_dimension_numbers<[1], [0], [0], [1], [0, 0, 1, 1], [], []>} : vector<8x32xf32>, vector<32x32xf32>, vector<8x32xf32> -> vector<8x32xf32>
    %58 = arith.addf %51, %57 : vector<8x32xf32>
    %59 = vector.extract_strided_slice %25 {offsets = [16, 0], sizes = [8, 32], strides = [1, 1]} : vector<24x32xf32> to vector<8x32xf32>
    %cst_41 = arith.constant dense<0.000000e+00> : vector<8x32xf32>
    %60 = tpu.matmul %55, %26, %cst_41 {dimension_numbers = #tpu.dot_dimension_numbers<[1], [0], [0], [1], [0, 0, 1, 1], [], []>} : vector<8x32xf32>, vector<32x32xf32>, vector<8x32xf32> -> vector<8x32xf32>
    %61 = arith.addf %59, %60 : vector<8x32xf32>
    %62 = math.tanh %61 : vector<8x32xf32>
    %c160 = arith.constant 160 : index
    %c0_42 = arith.constant 0 : index
    %63 = vector.load %arg9[%c160, %c0_42] : memref<224x32xf32, #tpu.memory_space<vmem>>, vector<32x32xf32>
    %cst_43 = arith.constant dense<0.000000e+00> : vector<8x32xf32>
    %64 = tpu.matmul %62, %63, %cst_43 {dimension_numbers = #tpu.dot_dimension_numbers<[1], [0], [0], [1], [0, 0, 1, 1], [], []>} : vector<8x32xf32>, vector<32x32xf32>, vector<8x32xf32> -> vector<8x32xf32>
    %65 = arith.addf %58, %64 : vector<8x32xf32>
    %66 = vector.extract_strided_slice %20 {offsets = [24, 0], sizes = [8, 32], strides = [1, 1]} : vector<32x32xf32> to vector<8x32xf32>
    %cst_44 = arith.constant dense<0.000000e+00> : vector<8x32xf32>
    %67 = tpu.matmul %62, %26, %cst_44 {dimension_numbers = #tpu.dot_dimension_numbers<[1], [0], [0], [1], [0, 0, 1, 1], [], []>} : vector<8x32xf32>, vector<32x32xf32>, vector<8x32xf32> -> vector<8x32xf32>
    %68 = arith.addf %66, %67 : vector<8x32xf32>
    %69 = math.tanh %68 : vector<8x32xf32>
    %c192 = arith.constant 192 : index
    %c0_45 = arith.constant 0 : index
    %70 = vector.load %arg9[%c192, %c0_45] : memref<224x32xf32, #tpu.memory_space<vmem>>, vector<32x32xf32>
    %cst_46 = arith.constant dense<0.000000e+00> : vector<8x32xf32>
    %71 = tpu.matmul %69, %70, %cst_46 {dimension_numbers = #tpu.dot_dimension_numbers<[1], [0], [0], [1], [0, 0, 1, 1], [], []>} : vector<8x32xf32>, vector<32x32xf32>, vector<8x32xf32> -> vector<8x32xf32>
    %72 = arith.addf %65, %71 : vector<8x32xf32>
    %c0_47 = arith.constant 0 : index
    %c0_48 = arith.constant 0 : index
    %73 = vector.load %arg10[%c0_47, %c0_48] : memref<1x32xf32, #tpu.memory_space<vmem>>, vector<1x32xf32>
    %74 = vector.broadcast %73 : vector<1x32xf32> to vector<8x32xf32>
    %75 = arith.addf %72, %74 : vector<8x32xf32>
    %c0_49 = arith.constant 0 : index
    %c0_50 = arith.constant 0 : index
    %76 = vector.load %arg11[%c0_49, %c0_50] : memref<8x32xf32, #tpu.memory_space<vmem>>, vector<8x32xf32>
    tpu.vector_store %arg11[%c0_49, %c0_50], %75 {strides = array<i32>} : memref<8x32xf32, #tpu.memory_space<vmem>>, vector<8x32xf32>,
    return
  }
}

</mosaic_0001>

<llo_original>
// kernel: tpu_custom_call.1
$region0: #{tpu_custom_call.1}
  #allocation0 [shape = 'u32[]', space=smem, size = 0x4, offset = 0x4, fixed_abs, tag = 'smem constant byte address 0x4 - core index']
  #allocation1 [shape = 'u32[72,128]{1,0:T(1,128)}', space=vmem, size = 0x9000, scoped, tag = 'internal scratch']
  %s0 = inlined_call_operand.vmem [shape: f32[32,16], index: 0, kind: input, shape index: {}]
  %s1 = inlined_call_operand.vmem [shape: f32[24,8], index: 1, kind: input, shape index: {}]
  %s2 = inlined_call_operand.vmem [shape: f32[16,32], index: 2, kind: input, shape index: {}]
  %s3 = inlined_call_operand.vmem [shape: f32[1,32], index: 3, kind: input, shape index: {}]
  %s4 = inlined_call_operand.vmem [shape: f32[8,32], index: 4, kind: input, shape index: {}]
  %s5 = inlined_call_operand.vmem [shape: f32[1,32], index: 5, kind: input, shape index: {}]
  %s6 = inlined_call_operand.vmem [shape: f32[32,32], index: 6, kind: input, shape index: {}]
  %s7 = inlined_call_operand.vmem [shape: f32[32,32], index: 7, kind: input, shape index: {}]
  %s8 = inlined_call_operand.vmem [shape: f32[1,32], index: 8, kind: input, shape index: {}]
  %s9 = inlined_call_operand.vmem [shape: f32[224,32], index: 9, kind: input, shape index: {}]
  %s10 = inlined_call_operand.vmem [shape: f32[1,32], index: 10, kind: input, shape index: {}]
  %s11 = inlined_call_operand.hbm [shape: f32[8,32], index: 11, kind: output, shape index: {}]
  %s12 = sld [smem:[#allocation0]]
  $region54: #{tpu_custom_call.1} parent=0
    _
  %s14 = ssub.s32 1, %s12
  %s15 = scalar_select 0, %s14, %s12
  $region1: #{tpu_custom_call.1} parent=0
    #allocation2 [shape = 'u8[4096]{0}', space=vmem, size = 0x1000, scoped, tag = 'output window, operand 0, single buffered']
    #allocation3 [shape = 's32[1]{0}', space=sflag, size = 0x4, scoped, tag = 'scoped memory for tpu_custom_call.1']
    %16 = vsyncpa [#allocation3], 0
    // Predicated region
    $region2: #{tpu_custom_call.1} parent=1 // pred_check
      _
    $region3: #{tpu_custom_call.1} parent=1 // pred_check_branch
      %18 = sbr.rel (0) target = $region5
    $region4: #{tpu_custom_call.1} parent=1 // pred_region
      _
    $region5: #{tpu_custom_call.1} parent=1 // pred_fallthru
      _
    // Predicated region
    $region6: #{tpu_custom_call.1} parent=1 // pred_check
      _
    $region7: #{tpu_custom_call.1} parent=1 // pred_check_branch
      %20 = sbr.rel (0) target = $region9
    $region8: #{tpu_custom_call.1} parent=1 // pred_region
      _
    $region9: #{tpu_custom_call.1} parent=1 // pred_fallthru
      _
    // Predicated region
    $region10: #{tpu_custom_call.1} parent=1 // pred_check
      _
    $region11: #{tpu_custom_call.1} parent=1 // pred_check_branch
      %22 = sbr.rel (0) target = $region13
    $region12: #{tpu_custom_call.1} parent=1 // pred_region
      _
    $region13: #{tpu_custom_call.1} parent=1 // pred_fallthru
      _
    // Predicated region
    $region14: #{tpu_custom_call.1} parent=1 // pred_check
      _
    $region15: #{tpu_custom_call.1} parent=1 // pred_check_branch
      %24 = sbr.rel (0) target = $region17
    $region16: #{tpu_custom_call.1} parent=1 // pred_region
      _
    $region17: #{tpu_custom_call.1} parent=1 // pred_fallthru
      _
    // Predicated region
    $region18: #{tpu_custom_call.1} parent=1 // pred_check
      _
    $region19: #{tpu_custom_call.1} parent=1 // pred_check_branch
      %26 = sbr.rel (0) target = $region21
    $region20: #{tpu_custom_call.1} parent=1 // pred_region
      _
    $region21: #{tpu_custom_call.1} parent=1 // pred_fallthru
      _
    // Predicated region
    $region22: #{tpu_custom_call.1} parent=1 // pred_check
      _
    $region23: #{tpu_custom_call.1} parent=1 // pred_check_branch
      %28 = sbr.rel (0) target = $region25
    $region24: #{tpu_custom_call.1} parent=1 // pred_region
      _
    $region25: #{tpu_custom_call.1} parent=1 // pred_fallthru
      _
    // Predicated region
    $region26: #{tpu_custom_call.1} parent=1 // pred_check
      _
    $region27: #{tpu_custom_call.1} parent=1 // pred_check_branch
      %30 = sbr.rel (0) target = $region29
    $region28: #{tpu_custom_call.1} parent=1 // pred_region
      _
    $region29: #{tpu_custom_call.1} parent=1 // pred_fallthru
      _
    // Predicated region
    $region30: #{tpu_custom_call.1} parent=1 // pred_check
      _
    $region31: #{tpu_custom_call.1} parent=1 // pred_check_branch
      %32 = sbr.rel (0) target = $region33
    $region32: #{tpu_custom_call.1} parent=1 // pred_region
      _
    $region33: #{tpu_custom_call.1} parent=1 // pred_fallthru
      _
    // Predicated region
    $region34: #{tpu_custom_call.1} parent=1 // pred_check
      _
    $region35: #{tpu_custom_call.1} parent=1 // pred_check_branch
      %34 = sbr.rel (0) target = $region37
    $region36: #{tpu_custom_call.1} parent=1 // pred_region
      _
    $region37: #{tpu_custom_call.1} parent=1 // pred_fallthru
      _
    // Predicated region
    $region38: #{tpu_custom_call.1} parent=1 // pred_check
      _
    $region39: #{tpu_custom_call.1} parent=1 // pred_check_branch
      %36 = sbr.rel (0) target = $region41
    $region40: #{tpu_custom_call.1} parent=1 // pred_region
      _
    $region41: #{tpu_custom_call.1} parent=1 // pred_fallthru
      _
    // Predicated region
    $region42: #{tpu_custom_call.1} parent=1 // pred_check
      _
    $region43: #{tpu_custom_call.1} parent=1 // pred_check_branch
      %38 = sbr.rel (0) target = $region45
    $region44: #{tpu_custom_call.1} parent=1 // pred_region
      _
    $region45: #{tpu_custom_call.1} parent=1 // pred_fallthru
      _
    %v39 = vld [vmem:[%s0] sm:$0xff]
    %v40 = vld [vmem:[%s0 + $0x8] sm:$0xff]
    %v41 = vld [vmem:[%s0 + $0x10] sm:$0xff]
    %v42 = vld [vmem:[%s0 + $0x18] sm:$0xff]
    %v43 = vld [vmem:[%s2] sm:$0xff]
    %v44 = vld [vmem:[%s2 + $0x8] sm:$0xff]
    %v45 = vld [vmem:[%s3] sm:$0x1]
    %v47 = vperm.slane %v45, 0
    %vm49 = vcmask 130048
    %v51 = vsel %vm49, %v39, 0
    %v54 = vsel %vm49, %v40, 0
    %v57 = vsel %vm49, %v41, 0
    %v60 = vsel %vm49, %v42, 0
    %62 = vmatpush.msra.mxu0 0.0
    %63 = vmatpush.msra.mxu0 0.0
    %64 = vmatpush.msra.mxu0 0.0
    %65 = vmatpush.msra.mxu0 0.0
    %66 = vmatpush.msra.mxu0 0.0
    %67 = vmatpush.msra.mxu0 0.0
    %68 = vmatpush.msra.mxu0 0.0
    %69 = vmatpush.msra.mxu0 0.0
    %70 = vmatpush.msra.mxu0 0.0
    %71 = vmatpush.msra.mxu0 0.0
    %72 = vmatpush.msra.mxu0 0.0
    %73 = vmatpush.msra.mxu0 0.0
    %74 = vmatpush.msra.mxu0 0.0
    %75 = vmatpush.msra.mxu0 0.0
    %76 = vmatpush.msra.mxu0 %v44
    %77 = vmatpush.msra.mxu0 %v43
    %78 = vmatmul.f32.gmra.mxu0 %v51
    %v79 = vpop.f32.mrf.mxu0
    %v80 = vadd.f32 %v47, %v79
    %81 = vmatmul.f32.gmra.mxu0 %v54
    %v82 = vpop.f32.mrf.mxu0
    %v83 = vadd.f32 %v47, %v82
    %84 = vmatmul.f32.gmra.mxu0 %v57
    %v85 = vpop.f32.mrf.mxu0
    %v86 = vadd.f32 %v47, %v85
    %87 = vmatmul.f32.gmra.mxu0 %v60
    %v88 = vpop.f32.mrf.mxu0
    %v89 = vadd.f32 %v47, %v88
    %90 = vdwg.mxu0
    %v91 = vmax.f32 %v80, 0.0
    %v92 = vmax.f32 %v83, 0.0
    %v93 = vmax.f32 %v86, 0.0
    %v94 = vmax.f32 %v89, 0.0
    %v95 = vld [vmem:[%s1] sm:$0xff]
    %v96 = vld [vmem:[%s1 + $0x8] sm:$0xff]
    %v97 = vld [vmem:[%s1 + $0x10] sm:$0xff]
    %v98 = vld [vmem:[%s4] sm:$0xff]
    %v99 = vld [vmem:[%s5] sm:$0x1]
    %v101 = vperm.slane %v99, 0
    %vm103 = vcmask 64512
    %v105 = vsel %vm103, %v95, 0
    %v108 = vsel %vm103, %v96, 0
    %v111 = vsel %vm103, %v97, 0
    %113 = vmatpush.msra.mxu0 0.0
    %114 = vmatpush.msra.mxu0 0.0
    %115 = vmatpush.msra.mxu0 0.0
    %116 = vmatpush.msra.mxu0 0.0
    %117 = vmatpush.msra.mxu0 0.0
    %118 = vmatpush.msra.mxu0 0.0
    %119 = vmatpush.msra.mxu0 0.0
    %120 = vmatpush.msra.mxu0 0.0
    %121 = vmatpush.msra.mxu0 0.0
    %122 = vmatpush.msra.mxu0 0.0
    %123 = vmatpush.msra.mxu0 0.0
    %124 = vmatpush.msra.mxu0 0.0
    %125 = vmatpush.msra.mxu0 0.0
    %126 = vmatpush.msra.mxu0 0.0
    %127 = vmatpush.msra.mxu0 0.0
    %128 = vmatpush.msra.mxu0 %v98
    %129 = vmatmul.f32.gmra.mxu0 %v105
    %v130 = vpop.f32.mrf.mxu0
    %v131 = vadd.f32 %v101, %v130
    %132 = vmatmul.f32.gmra.mxu0 %v108
    %v133 = vpop.f32.mrf.mxu0
    %v134 = vadd.f32 %v101, %v133
    %135 = vmatmul.f32.gmra.mxu0 %v111
    %v136 = vpop.f32.mrf.mxu0
    %v137 = vadd.f32 %v101, %v136
    %138 = vdwg.mxu0
    %v139 = vmax.f32 %v131, 0.0
    %v140 = vmax.f32 %v134, 0.0
    %v141 = vmax.f32 %v137, 0.0
    %v142 = vld [vmem:[%s6] sm:$0xff]
    %v143 = vld [vmem:[%s6 + $0x8] sm:$0xff]
    %v144 = vld [vmem:[%s6 + $0x10] sm:$0xff]
    %v145 = vld [vmem:[%s6 + $0x18] sm:$0xff]
    %v146 = vld [vmem:[%s8] sm:$0x1]
    %v148 = vperm.slane %v146, 0
    %vm150 = vcmask 261120
    %v152 = vsel %vm150, %v91, 0
    %v155 = vsel %vm150, %v92, 0
    %v158 = vsel %vm150, %v93, 0
    %v161 = vsel %vm150, %v94, 0
    %163 = vmatpush.msra.mxu0 0.0
    %164 = vmatpush.msra.mxu0 0.0
    %165 = vmatpush.msra.mxu0 0.0
    %166 = vmatpush.msra.mxu0 0.0
    %167 = vmatpush.msra.mxu0 0.0
    %168 = vmatpush.msra.mxu0 0.0
    %169 = vmatpush.msra.mxu0 0.0
    %170 = vmatpush.msra.mxu0 0.0
    %171 = vmatpush.msra.mxu0 0.0
    %172 = vmatpush.msra.mxu0 0.0
    %173 = vmatpush.msra.mxu0 0.0
    %174 = vmatpush.msra.mxu0 0.0
    %175 = vmatpush.msra.mxu0 %v145
    %176 = vmatpush.msra.mxu0 %v144
    %177 = vmatpush.msra.mxu0 %v143
    %178 = vmatpush.msra.mxu0 %v142
    %179 = vmatmul.f32.gmra.mxu0 %v152
    %v180 = vpop.f32.mrf.mxu0
    %v181 = vadd.f32 %v148, %v180
    %182 = vmatmul.f32.gmra.mxu0 %v155
    %v183 = vpop.f32.mrf.mxu0
    %v184 = vadd.f32 %v148, %v183
    %185 = vmatmul.f32.gmra.mxu0 %v158
    %v186 = vpop.f32.mrf.mxu0
    %v187 = vadd.f32 %v148, %v186
    %188 = vmatmul.f32.gmra.mxu0 %v161
    %v189 = vpop.f32.mrf.mxu0
    %v190 = vadd.f32 %v148, %v189
    %191 = vdwg.mxu0
    %v193 = vsel %vm150, %v139, 0
    %v196 = vsel %vm150, %v140, 0
    %v199 = vsel %vm150, %v141, 0
    %201 = vmatpush.msra.mxu0 0.0
    %202 = vmatpush.msra.mxu0 0.0
    %203 = vmatpush.msra.mxu0 0.0
    %204 = vmatpush.msra.mxu0 0.0
    %205 = vmatpush.msra.mxu0 0.0
    %206 = vmatpush.msra.mxu0 0.0
    %207 = vmatpush.msra.mxu0 0.0
    %208 = vmatpush.msra.mxu0 0.0
    %209 = vmatpush.msra.mxu0 0.0
    %210 = vmatpush.msra.mxu0 0.0
    %211 = vmatpush.msra.mxu0 0.0
    %212 = vmatpush.msra.mxu0 0.0
    %213 = vmatpush.msra.mxu0 %v145
    %214 = vmatpush.msra.mxu0 %v144
    %215 = vmatpush.msra.mxu0 %v143
    %216 = vmatpush.msra.mxu0 %v142
    %217 = vmatmul.f32.gmra.mxu0 %v193
    %v218 = vpop.f32.mrf.mxu0
    %v219 = vadd.f32 %v148, %v218
    %220 = vmatmul.f32.gmra.mxu0 %v196
    %v221 = vpop.f32.mrf.mxu0
    %v222 = vadd.f32 %v148, %v221
    %223 = vmatmul.f32.gmra.mxu0 %v199
    %v224 = vpop.f32.mrf.mxu0
    %v225 = vadd.f32 %v148, %v224
    %226 = vdwg.mxu0
    %v227 = vld [vmem:[%s7] sm:$0xff]
    %v228 = vld [vmem:[%s7 + $0x8] sm:$0xff]
    %v229 = vld [vmem:[%s7 + $0x10] sm:$0xff]
    %v230 = vld [vmem:[%s7 + $0x18] sm:$0xff]
    %v231 = vtanh.pop %v181
    %v232 = vld [vmem:[%s9] sm:$0xff]
    %v233 = vld [vmem:[%s9 + $0x8] sm:$0xff]
    %v234 = vld [vmem:[%s9 + $0x10] sm:$0xff]
    %v235 = vld [vmem:[%s9 + $0x18] sm:$0xff]
    %v237 = vsel %vm150, %v231, 0
    %239 = vmatpush.msra.mxu0 0.0
    %240 = vmatpush.msra.mxu0 0.0
    %241 = vmatpush.msra.mxu0 0.0
    %242 = vmatpush.msra.mxu0 0.0
    %243 = vmatpush.msra.mxu0 0.0
    %244 = vmatpush.msra.mxu0 0.0
    %245 = vmatpush.msra.mxu0 0.0
    %246 = vmatpush.msra.mxu0 0.0
    %247 = vmatpush.msra.mxu0 0.0
    %248 = vmatpush.msra.mxu0 0.0
    %249 = vmatpush.msra.mxu0 0.0
    %250 = vmatpush.msra.mxu0 0.0
    %251 = vmatpush.msra.mxu0 %v230
    %252 = vmatpush.msra.mxu0 %v229
    %253 = vmatpush.msra.mxu0 %v228
    %254 = vmatpush.msra.mxu0 %v227
    %255 = vmatmul.f32.gmra.mxu0 %v237
    %v256 = vpop.f32.mrf.mxu0
    %v257 = vadd.f32 0.0, %v256
    %258 = vdwg.mxu0
    %v259 = vadd.f32 %v219, %v257
    %v260 = vtanh.pop %v259
    %v261 = vld [vmem:[%s9 + $0x20] sm:$0xff]
    %v262 = vld [vmem:[%s9 + $0x28] sm:$0xff]
    %v263 = vld [vmem:[%s9 + $0x30] sm:$0xff]
    %v264 = vld [vmem:[%s9 + $0x38] sm:$0xff]
    %v266 = vsel %vm150, %v260, 0
    %268 = vmatpush.msra.mxu0 0.0
    %269 = vmatpush.msra.mxu0 0.0
    %270 = vmatpush.msra.mxu0 0.0
    %271 = vmatpush.msra.mxu0 0.0
    %272 = vmatpush.msra.mxu0 0.0
    %273 = vmatpush.msra.mxu0 0.0
    %274 = vmatpush.msra.mxu0 0.0
    %275 = vmatpush.msra.mxu0 0.0
    %276 = vmatpush.msra.mxu0 0.0
    %277 = vmatpush.msra.mxu0 0.0
    %278 = vmatpush.msra.mxu0 0.0
    %279 = vmatpush.msra.mxu0 0.0
    %280 = vmatpush.msra.mxu0 %v264
    %281 = vmatpush.msra.mxu0 %v263
    %282 = vmatpush.msra.mxu0 %v262
    %283 = vmatpush.msra.mxu0 %v261
    %284 = vmatmul.f32.gmra.mxu0 %v266
    %v285 = vpop.f32.mrf.mxu0
    %v286 = vadd.f32 0.0, %v285
    %287 = vdwg.mxu0
    %288 = vmatpush.msra.mxu0 0.0
    %289 = vmatpush.msra.mxu0 0.0
    %290 = vmatpush.msra.mxu0 0.0
    %291 = vmatpush.msra.mxu0 0.0
    %292 = vmatpush.msra.mxu0 0.0
    %293 = vmatpush.msra.mxu0 0.0
    %294 = vmatpush.msra.mxu0 0.0
    %295 = vmatpush.msra.mxu0 0.0
    %296 = vmatpush.msra.mxu0 0.0
    %297 = vmatpush.msra.mxu0 0.0
    %298 = vmatpush.msra.mxu0 0.0
    %299 = vmatpush.msra.mxu0 0.0
    %300 = vmatpush.msra.mxu0 %v235
    %301 = vmatpush.msra.mxu0 %v234
    %302 = vmatpush.msra.mxu0 %v233
    %303 = vmatpush.msra.mxu0 %v232
    %304 = vmatmul.f32.gmra.mxu0 %v237
    %v305 = vpop.f32.mrf.mxu0
    %v306 = vadd.f32 %v286, %v305
    %307 = vdwg.mxu0
    %308 = vmatpush.msra.mxu0 0.0
    %309 = vmatpush.msra.mxu0 0.0
    %310 = vmatpush.msra.mxu0 0.0
    %311 = vmatpush.msra.mxu0 0.0
    %312 = vmatpush.msra.mxu0 0.0
    %313 = vmatpush.msra.mxu0 0.0
    %314 = vmatpush.msra.mxu0 0.0
    %315 = vmatpush.msra.mxu0 0.0
    %316 = vmatpush.msra.mxu0 0.0
    %317 = vmatpush.msra.mxu0 0.0
    %318 = vmatpush.msra.mxu0 0.0
    %319 = vmatpush.msra.mxu0 0.0
    %320 = vmatpush.msra.mxu0 %v230
    %321 = vmatpush.msra.mxu0 %v229
    %322 = vmatpush.msra.mxu0 %v228
    %323 = vmatpush.msra.mxu0 %v227
    %324 = vmatmul.f32.gmra.mxu0 %v266
    %v325 = vpop.f32.mrf.mxu0
    %v326 = vadd.f32 0.0, %v325
    %327 = vdwg.mxu0
    %v328 = vadd.f32 %v184, %v326
    %v329 = vtanh.pop %v328
    %v330 = vld [vmem:[%s9 + $0x40] sm:$0xff]
    %v331 = vld [vmem:[%s9 + $0x48] sm:$0xff]
    %v332 = vld [vmem:[%s9 + $0x50] sm:$0xff]
    %v333 = vld [vmem:[%s9 + $0x58] sm:$0xff]
    %v335 = vsel %vm150, %v329, 0
    %337 = vmatpush.msra.mxu0 0.0
    %338 = vmatpush.msra.mxu0 0.0
    %339 = vmatpush.msra.mxu0 0.0
    %340 = vmatpush.msra.mxu0 0.0
    %341 = vmatpush.msra.mxu0 0.0
    %342 = vmatpush.msra.mxu0 0.0
    %343 = vmatpush.msra.mxu0 0.0
    %344 = vmatpush.msra.mxu0 0.0
    %345 = vmatpush.msra.mxu0 0.0
    %346 = vmatpush.msra.mxu0 0.0
    %347 = vmatpush.msra.mxu0 0.0
    %348 = vmatpush.msra.mxu0 0.0
    %349 = vmatpush.msra.mxu0 %v333
    %350 = vmatpush.msra.mxu0 %v332
    %351 = vmatpush.msra.mxu0 %v331
    %352 = vmatpush.msra.mxu0 %v330
    %353 = vmatmul.f32.gmra.mxu0 %v335
    %v354 = vpop.f32.mrf.mxu0
    %v355 = vadd.f32 0.0, %v354
    %356 = vdwg.mxu0
    %v357 = vadd.f32 %v306, %v355
    %358 = vmatpush.msra.mxu0 0.0
    %359 = vmatpush.msra.mxu0 0.0
    %360 = vmatpush.msra.mxu0 0.0
    %361 = vmatpush.msra.mxu0 0.0
    %362 = vmatpush.msra.mxu0 0.0
    %363 = vmatpush.msra.mxu0 0.0
    %364 = vmatpush.msra.mxu0 0.0
    %365 = vmatpush.msra.mxu0 0.0
    %366 = vmatpush.msra.mxu0 0.0
    %367 = vmatpush.msra.mxu0 0.0
    %368 = vmatpush.msra.mxu0 0.0
    %369 = vmatpush.msra.mxu0 0.0
    %370 = vmatpush.msra.mxu0 %v230
    %371 = vmatpush.msra.mxu0 %v229
    %372 = vmatpush.msra.mxu0 %v228
    %373 = vmatpush.msra.mxu0 %v227
    %374 = vmatmul.f32.gmra.mxu0 %v335
    %v375 = vpop.f32.mrf.mxu0
    %v376 = vadd.f32 0.0, %v375
    %377 = vdwg.mxu0
    %v378 = vadd.f32 %v222, %v376
    %v379 = vtanh.pop %v378
    %v380 = vld [vmem:[%s9 + $0x60] sm:$0xff]
    %v381 = vld [vmem:[%s9 + $0x68] sm:$0xff]
    %v382 = vld [vmem:[%s9 + $0x70] sm:$0xff]
    %v383 = vld [vmem:[%s9 + $0x78] sm:$0xff]
    %v385 = vsel %vm150, %v379, 0
    %387 = vmatpush.msra.mxu0 0.0
    %388 = vmatpush.msra.mxu0 0.0
    %389 = vmatpush.msra.mxu0 0.0
    %390 = vmatpush.msra.mxu0 0.0
    %391 = vmatpush.msra.mxu0 0.0
    %392 = vmatpush.msra.mxu0 0.0
    %393 = vmatpush.msra.mxu0 0.0
    %394 = vmatpush.msra.mxu0 0.0
    %395 = vmatpush.msra.mxu0 0.0
    %396 = vmatpush.msra.mxu0 0.0
    %397 = vmatpush.msra.mxu0 0.0
    %398 = vmatpush.msra.mxu0 0.0
    %399 = vmatpush.msra.mxu0 %v383
    %400 = vmatpush.msra.mxu0 %v382
    %401 = vmatpush.msra.mxu0 %v381
    %402 = vmatpush.msra.mxu0 %v380
    %403 = vmatmul.f32.gmra.mxu0 %v385
    %v404 = vpop.f32.mrf.mxu0
    %v405 = vadd.f32 0.0, %v404
    %406 = vdwg.mxu0
    %v407 = vadd.f32 %v357, %v405
    %408 = vmatpush.msra.mxu0 0.0
    %409 = vmatpush.msra.mxu0 0.0
    %410 = vmatpush.msra.mxu0 0.0
    %411 = vmatpush.msra.mxu0 0.0
    %412 = vmatpush.msra.mxu0 0.0
    %413 = vmatpush.msra.mxu0 0.0
    %414 = vmatpush.msra.mxu0 0.0
    %415 = vmatpush.msra.mxu0 0.0
    %416 = vmatpush.msra.mxu0 0.0
    %417 = vmatpush.msra.mxu0 0.0
    %418 = vmatpush.msra.mxu0 0.0
    %419 = vmatpush.msra.mxu0 0.0
    %420 = vmatpush.msra.mxu0 %v230
    %421 = vmatpush.msra.mxu0 %v229
    %422 = vmatpush.msra.mxu0 %v228
    %423 = vmatpush.msra.mxu0 %v227
    %424 = vmatmul.f32.gmra.mxu0 %v385
    %v425 = vpop.f32.mrf.mxu0
    %v426 = vadd.f32 0.0, %v425
    %427 = vdwg.mxu0
    %v428 = vadd.f32 %v187, %v426
    %v429 = vtanh.pop %v428
    %v430 = vld [vmem:[%s9 + $0x80] sm:$0xff]
    %v431 = vld [vmem:[%s9 + $0x88] sm:$0xff]
    %v432 = vld [vmem:[%s9 + $0x90] sm:$0xff]
    %v433 = vld [vmem:[%s9 + $0x98] sm:$0xff]
    %v435 = vsel %vm150, %v429, 0
    %437 = vmatpush.msra.mxu0 0.0
    %438 = vmatpush.msra.mxu0 0.0
    %439 = vmatpush.msra.mxu0 0.0
    %440 = vmatpush.msra.mxu0 0.0
    %441 = vmatpush.msra.mxu0 0.0
    %442 = vmatpush.msra.mxu0 0.0
    %443 = vmatpush.msra.mxu0 0.0
    %444 = vmatpush.msra.mxu0 0.0
    %445 = vmatpush.msra.mxu0 0.0
    %446 = vmatpush.msra.mxu0 0.0
    %447 = vmatpush.msra.mxu0 0.0
    %448 = vmatpush.msra.mxu0 0.0
    %449 = vmatpush.msra.mxu0 %v433
    %450 = vmatpush.msra.mxu0 %v432
    %451 = vmatpush.msra.mxu0 %v431
    %452 = vmatpush.msra.mxu0 %v430
    %453 = vmatmul.f32.gmra.mxu0 %v435
    %v454 = vpop.f32.mrf.mxu0
    %v455 = vadd.f32 0.0, %v454
    %456 = vdwg.mxu0
    %v457 = vadd.f32 %v407, %v455
    %458 = vmatpush.msra.mxu0 0.0
    %459 = vmatpush.msra.mxu0 0.0
    %460 = vmatpush.msra.mxu0 0.0
    %461 = vmatpush.msra.mxu0 0.0
    %462 = vmatpush.msra.mxu0 0.0
    %463 = vmatpush.msra.mxu0 0.0
    %464 = vmatpush.msra.mxu0 0.0
    %465 = vmatpush.msra.mxu0 0.0
    %466 = vmatpush.msra.mxu0 0.0
    %467 = vmatpush.msra.mxu0 0.0
    %468 = vmatpush.msra.mxu0 0.0
    %469 = vmatpush.msra.mxu0 0.0
    %470 = vmatpush.msra.mxu0 %v230
    %471 = vmatpush.msra.mxu0 %v229
    %472 = vmatpush.msra.mxu0 %v228
    %473 = vmatpush.msra.mxu0 %v227
    %474 = vmatmul.f32.gmra.mxu0 %v435
    %v475 = vpop.f32.mrf.mxu0
    %v476 = vadd.f32 0.0, %v475
    %477 = vdwg.mxu0
    %v478 = vadd.f32 %v225, %v476
    %v479 = vtanh.pop %v478
    %v480 = vld [vmem:[%s9 + $0xa0] sm:$0xff]
    %v481 = vld [vmem:[%s9 + $0xa8] sm:$0xff]
    %v482 = vld [vmem:[%s9 + $0xb0] sm:$0xff]
    %v483 = vld [vmem:[%s9 + $0xb8] sm:$0xff]
    %v485 = vsel %vm150, %v479, 0
    %487 = vmatpush.msra.mxu0 0.0
    %488 = vmatpush.msra.mxu0 0.0
    %489 = vmatpush.msra.mxu0 0.0
    %490 = vmatpush.msra.mxu0 0.0
    %491 = vmatpush.msra.mxu0 0.0
    %492 = vmatpush.msra.mxu0 0.0
    %493 = vmatpush.msra.mxu0 0.0
    %494 = vmatpush.msra.mxu0 0.0
    %495 = vmatpush.msra.mxu0 0.0
    %496 = vmatpush.msra.mxu0 0.0
    %497 = vmatpush.msra.mxu0 0.0
    %498 = vmatpush.msra.mxu0 0.0
    %499 = vmatpush.msra.mxu0 %v483
    %500 = vmatpush.msra.mxu0 %v482
    %501 = vmatpush.msra.mxu0 %v481
    %502 = vmatpush.msra.mxu0 %v480
    %503 = vmatmul.f32.gmra.mxu0 %v485
    %v504 = vpop.f32.mrf.mxu0
    %v505 = vadd.f32 0.0, %v504
    %506 = vdwg.mxu0
    %v507 = vadd.f32 %v457, %v505
    %508 = vmatpush.msra.mxu0 0.0
    %509 = vmatpush.msra.mxu0 0.0
    %510 = vmatpush.msra.mxu0 0.0
    %511 = vmatpush.msra.mxu0 0.0
    %512 = vmatpush.msra.mxu0 0.0
    %513 = vmatpush.msra.mxu0 0.0
    %514 = vmatpush.msra.mxu0 0.0
    %515 = vmatpush.msra.mxu0 0.0
    %516 = vmatpush.msra.mxu0 0.0
    %517 = vmatpush.msra.mxu0 0.0
    %518 = vmatpush.msra.mxu0 0.0
    %519 = vmatpush.msra.mxu0 0.0
    %520 = vmatpush.msra.mxu0 %v230
    %521 = vmatpush.msra.mxu0 %v229
    %522 = vmatpush.msra.mxu0 %v228
    %523 = vmatpush.msra.mxu0 %v227
    %524 = vmatmul.f32.gmra.mxu0 %v485
    %v525 = vpop.f32.mrf.mxu0
    %v526 = vadd.f32 0.0, %v525
    %527 = vdwg.mxu0
    %v528 = vadd.f32 %v190, %v526
    %v529 = vtanh.pop %v528
    %v530 = vld [vmem:[%s9 + $0xc0] sm:$0xff]
    %v531 = vld [vmem:[%s9 + $0xc8] sm:$0xff]
    %v532 = vld [vmem:[%s9 + $0xd0] sm:$0xff]
    %v533 = vld [vmem:[%s9 + $0xd8] sm:$0xff]
    %v535 = vsel %vm150, %v529, 0
    %537 = vmatpush.msra.mxu0 0.0
    %538 = vmatpush.msra.mxu0 0.0
    %539 = vmatpush.msra.mxu0 0.0
    %540 = vmatpush.msra.mxu0 0.0
    %541 = vmatpush.msra.mxu0 0.0
    %542 = vmatpush.msra.mxu0 0.0
    %543 = vmatpush.msra.mxu0 0.0
    %544 = vmatpush.msra.mxu0 0.0
    %545 = vmatpush.msra.mxu0 0.0
    %546 = vmatpush.msra.mxu0 0.0
    %547 = vmatpush.msra.mxu0 0.0
    %548 = vmatpush.msra.mxu0 0.0
    %549 = vmatpush.msra.mxu0 %v533
    %550 = vmatpush.msra.mxu0 %v532
    %551 = vmatpush.msra.mxu0 %v531
    %552 = vmatpush.msra.mxu0 %v530
    %553 = vmatmul.f32.gmra.mxu0 %v535
    %v554 = vpop.f32.mrf.mxu0
    %v555 = vadd.f32 0.0, %v554
    %556 = vdwg.mxu0
    %v557 = vadd.f32 %v507, %v555
    %v558 = vld [vmem:[%s10] sm:$0x1]
    %v560 = vperm.slane %v558, 0
    %v562 = vadd.f32 %v557, %v560
    %563 = vst.msk [vmem:[#allocation2] sm:$0xff] %vm150, %v562
    // Predicated region
    $region46: #{tpu_custom_call.1} parent=1 // pred_check
      _
    $region47: #{tpu_custom_call.1} parent=1 // pred_check_branch
      %565 = sbr.rel (0) target = $region49
    $region48: #{tpu_custom_call.1} parent=1 // pred_region
      %567 = vsyncadd [#allocation3], 0
      %s569 = sshll.u32 [#allocation2], 4
      %s570 = int_to_ptr.vmem [resolvable:$true] %s569
      %s571 = sshll.u32 %s11, 4
      %s572 = int_to_ptr.hbm [resolvable:$true] %s571
      %574 = dma.vmem_to_hbm [thread:$0]  %s570, 128, %s572, [#allocation3]
    $region49: #{tpu_custom_call.1} parent=1 // pred_fallthru
      _
    // Predicated region
    $region50: #{tpu_custom_call.1} parent=1 // pred_check
      _
    $region51: #{tpu_custom_call.1} parent=1 // pred_check_branch
      %576 = sbr.rel (0) target = $region53
    $region52: #{tpu_custom_call.1} parent=1 // pred_region
      %578 = dma.done [#allocation3], 128
    $region53: #{tpu_custom_call.1} parent=1 // pred_fallthru
      _
    %579 = vsyncpa [#allocation3], 1

</llo_original>
